<compile_context>
chip_gen: v7x
topology: tpu7x:2x2x1
jax: 0.10.0
libtpu: 0.0.40
codegen_flags: <defaults>
</compile_context>

<pallas_src>
import jax
import jax.numpy as jnp
from jax.experimental import pallas as pl
from jax.experimental.pallas import tpu as pltpu

# Hyperparameters implied by the module's __init__ (kept small & synthetic).
N_EMBD = 32       # n_embd
HEAD_SIZE = 16    # head_size
BLOCK_SIZE = 8    # block_size (max sequence length, size of the tril buffer)
DROPOUT = 0.0     # dropout — inference / eval mode => identity
# TODO(synk): training-mode dropout on the attention matrix is not implemented
# (eval-mode nn.Dropout is the identity, which is what we reproduce here).


def _head_kernel(x_ref, w_ref, o_ref):
    # x_ref: (BB, T, C)  — BB batch elements packed into this program
    # w_ref: (C, 3*H)    — fused [wk | wq | wv]
    # o_ref: (BB, T*H)   — lane-dense output (T*H == 128)
    H = HEAD_SIZE
    x = x_ref[...].astype(jnp.float32)          # (BB, T, C)
    w = w_ref[...].astype(jnp.float32)          # (C, 3H)

    # Fused QKV projection: single MXU matmul with M = BB*T, N = 3H.
    proj = jnp.einsum("btc,cn->btn", x, w,
                      preferred_element_type=jnp.float32)   # (BB, T, 3H)
    k = proj[..., 0 * H:1 * H]                               # (BB, T, H)
    q = proj[..., 1 * H:2 * H]                               # (BB, T, H)
    v = proj[..., 2 * H:3 * H]                               # (BB, T, H)

    # Scaled attention scores, contracting the head dims directly
    # (no materialized k.T / XLU transpose).
    scale = jnp.float32(H) ** jnp.float32(-0.5)
    scores = jnp.einsum("btd,bsd->bts", q, k,
                        preferred_element_type=jnp.float32) * scale  # (BB, T, T)

    # Causal mask (lower-triangular): masked positions -> -inf.
    row = jax.lax.broadcasted_iota(jnp.int32, scores.shape, 1)
    col = jax.lax.broadcasted_iota(jnp.int32, scores.shape, 2)
    scores = jnp.where(row >= col, scores, -jnp.inf)

    # Numerically stable softmax; divide routed to the EUP via reciprocal.
    m = jnp.max(scores, axis=-1, keepdims=True)
    e = jnp.exp(scores - m)
    denom = jnp.sum(e, axis=-1, keepdims=True)
    probs = e * pl.reciprocal(denom, approx=True)

    # Dropout is identity in eval mode (DROPOUT applied as no-op).

    # Weighted sum of values: (BB, T, H).
    out = jnp.einsum("bts,bsh->bth", probs, v,
                     preferred_element_type=jnp.float32)

    # Lane-dense store: collapse (T, H) -> T*H = 128 lanes.
    o_ref[...] = out.reshape(out.shape[0], -1).astype(o_ref.dtype)


def head_forward(x, wk, wq, wv, *, num_blocks=1):
    """x: (B, T, C) float32; weights: (C, HEAD_SIZE). Returns (B, T, HEAD_SIZE).

    num_blocks: how many grid steps to split the batch into.  1 is best on
    v5e/v6e (single TensorCore); use 2 on v7x so both TCs get work.
    """
    B, T, C = x.shape
    assert C == N_EMBD and T <= BLOCK_SIZE
    assert B % num_blocks == 0
    H = HEAD_SIZE
    BB = B // num_blocks

    # Fuse the three projection weights -> one (C, 3H) matmul / one DMA.
    w = jnp.concatenate([wk, wq, wv], axis=1)   # (C, 3H)

    out_flat = pl.pallas_call(
        _head_kernel,
        out_shape=jax.ShapeDtypeStruct((B, T * H), x.dtype),
        grid_spec=pltpu.PrefetchScalarGridSpec(
            num_scalar_prefetch=0,
            grid=(num_blocks,),
            in_specs=[
                pl.BlockSpec((BB, T, C), lambda i: (i, 0, 0)),
                pl.BlockSpec((C, 3 * H), lambda i: (0, 0)),
            ],
            out_specs=pl.BlockSpec((BB, T * H), lambda i: (i, 0)),
        ),
        compiler_params=pltpu.CompilerParams(
            dimension_semantics=("parallel",)
        ),
    )(x, w)
    return out_flat.reshape(B, T, H)


def _reference(x, wk, wq, wv):
    # Pure-JAX reference mirroring the PyTorch forward.
    k = x @ wk
    q = x @ wq
    v = x @ wv
    scores = (q @ jnp.swapaxes(k, -2, -1)) * (HEAD_SIZE ** -0.5)
    T = x.shape[1]
    tril = jnp.tril(jnp.ones((T, T), dtype=bool))
    scores = jnp.where(tril, scores, -jnp.inf)
    probs = jax.nn.softmax(scores, axis=-1)
    return probs @ v


if __name__ == "__main__":
    key = jax.random.PRNGKey(0)
    kx, kk, kq, kv = jax.random.split(key, 4)

    B, T = 2, BLOCK_SIZE
    x = jax.random.normal(kx, (B, T, N_EMBD), dtype=jnp.float32)

    # Deterministic synthetic parameters (nn.Linear-like scale), stored (C, H).
    scale = 1.0 / (N_EMBD ** 0.5)
    wk = jax.random.uniform(kk, (N_EMBD, HEAD_SIZE), jnp.float32, -scale, scale)
    wq = jax.random.uniform(kq, (N_EMBD, HEAD_SIZE), jnp.float32, -scale, scale)
    wv = jax.random.uniform(kv, (N_EMBD, HEAD_SIZE), jnp.float32, -scale, scale)

    out = head_forward(x, wk, wq, wv)
    out = jax.block_until_ready(out)

    ref = _reference(x, wk, wq, wv)
    assert out.shape == (B, T, HEAD_SIZE)
    # approx reciprocal (EUP vrcp) introduces ~1e-4 relative error; tolerance
    # is set accordingly.
    assert jnp.allclose(out, ref, atol=2e-3, rtol=2e-3)

    print("KERNEL_OK")
</pallas_src>

<mosaic_0001>
module attributes {stable_mosaic.version = 11 : i64} {
  func.func @_head_kernel(%arg0: i32, %arg1: memref<2x8x32xf32, #tpu.memory_space<vmem>>, %arg2: memref<32x48xf32, #tpu.memory_space<vmem>>, %arg3: memref<2x128xf32, #tpu.memory_space<vmem>>) attributes {dimension_semantics = [#tpu.dimension_semantics<parallel>], iteration_bounds = array<i64: 1>, scalar_prefetch = 0 : i64, scratch_operands = 0 : i64, tpu.core_type = #tpu.core_type<tc>, window_params = [{transform_indices = @transform_0, window_bounds = array<i64: 2, 8, 32>}, {pipeline_mode = #tpu.pipeline_mode<synchronous>, transform_indices = @transform_1, window_bounds = array<i64: 32, 48>}, {transform_indices = @transform_2, window_bounds = array<i64: 2, 128>}]} {
    %c0 = arith.constant 0 : index
    %c0_0 = arith.constant 0 : index
    %c0_1 = arith.constant 0 : index
    %0 = vector.load %arg1[%c0, %c0_0, %c0_1] : memref<2x8x32xf32, #tpu.memory_space<vmem>>, vector<2x8x32xf32>
    %c0_2 = arith.constant 0 : index
    %c0_3 = arith.constant 0 : index
    %1 = vector.load %arg2[%c0_2, %c0_3] : memref<32x48xf32, #tpu.memory_space<vmem>>, vector<32x48xf32>
    "tpu.trace_start"() <{level = 10 : i32, message = "btc,cn->btn"}> : () -> ()
    %cst = arith.constant dense<0.000000e+00> : vector<2x8x48xf32>
    %2 = tpu.matmul %0, %1, %cst {dimension_numbers = #tpu.dot_dimension_numbers<[2], [0], [0, 1], [1], [0, 0, 0, 1, 1, 1], [], []>} : vector<2x8x32xf32>, vector<32x48xf32>, vector<2x8x48xf32> -> vector<2x8x48xf32>
    "tpu.trace_stop"() : () -> ()
    %3 = vector.extract_strided_slice %2 {offsets = [0, 0, 0], sizes = [2, 8, 16], strides = [1, 1, 1]} : vector<2x8x48xf32> to vector<2x8x16xf32>
    %4 = vector.extract_strided_slice %2 {offsets = [0, 0, 16], sizes = [2, 8, 16], strides = [1, 1, 1]} : vector<2x8x48xf32> to vector<2x8x16xf32>
    %5 = vector.extract_strided_slice %2 {offsets = [0, 0, 32], sizes = [2, 8, 16], strides = [1, 1, 1]} : vector<2x8x48xf32> to vector<2x8x16xf32>
    %cst_4 = arith.constant 1.600000e+01 : f32
    %cst_5 = arith.constant -5.000000e-01 : f32
    %6 = math.powf %cst_4, %cst_5 : f32
    "tpu.trace_start"() <{level = 10 : i32, message = "btd,bsd->bts"}> : () -> ()
    %cst_6 = arith.constant dense<0.000000e+00> : vector<2x8x8xf32>
    %7 = tpu.matmul %4, %3, %cst_6 {dimension_numbers = #tpu.dot_dimension_numbers<[2], [2], [1], [1], [0, 0, 0, 1, 1, 1], [0], [0]>} : vector<2x8x16xf32>, vector<2x8x16xf32>, vector<2x8x8xf32> -> vector<2x8x8xf32>
    "tpu.trace_stop"() : () -> ()
    %8 = vector.broadcast %6 : f32 to vector<2x8x8xf32>
    %9 = arith.mulf %7, %8 : vector<2x8x8xf32>
    %10 = tpu.iota {dimensions = array<i32: 1>} : vector<2x8x8xi32>
    %11 = tpu.iota {dimensions = array<i32: 2>} : vector<2x8x8xi32>
    %12 = arith.cmpi sge, %10, %11 : vector<2x8x8xi32>
    %cst_7 = arith.constant 0xFF800000 : f32
    %13 = vector.broadcast %cst_7 : f32 to vector<2x8x8xf32>
    %14 = arith.select %12, %9, %13 : vector<2x8x8xi1>, vector<2x8x8xf32>
    %cst_8 = arith.constant dense<0xFF800000> : vector<2x8xf32>
    %15 = vector.multi_reduction <maximumf>, %14, %cst_8 [2] : vector<2x8x8xf32> to vector<2x8xf32>
    %16 = vector.shape_cast %15 : vector<2x8xf32> to vector<2x8x1xf32>
    %17 = vector.broadcast %16 : vector<2x8x1xf32> to vector<2x8x8xf32>
    %18 = arith.subf %14, %17 : vector<2x8x8xf32>
    %19 = math.exp %18 : vector<2x8x8xf32>
    %cst_9 = arith.constant dense<0.000000e+00> : vector<2x8xf32>
    %20 = vector.multi_reduction <add>, %19, %cst_9 [2] : vector<2x8x8xf32> to vector<2x8xf32>
    %21 = vector.shape_cast %20 : vector<2x8xf32> to vector<2x8x1xf32>
    %22 = tpu.reciprocal %21 {approx = true} : vector<2x8x1xf32> -> vector<2x8x1xf32>
    %23 = vector.broadcast %22 : vector<2x8x1xf32> to vector<2x8x8xf32>
    %24 = arith.mulf %19, %23 : vector<2x8x8xf32>
    "tpu.trace_start"() <{level = 10 : i32, message = "bts,bsh->bth"}> : () -> ()
    %cst_10 = arith.constant dense<0.000000e+00> : vector<2x8x16xf32>
    %25 = tpu.matmul %24, %5, %cst_10 {dimension_numbers = #tpu.dot_dimension_numbers<[2], [1], [1], [2], [0, 0, 0, 1, 1, 2], [0], [0]>} : vector<2x8x8xf32>, vector<2x8x16xf32>, vector<2x8x16xf32> -> vector<2x8x16xf32>
    "tpu.trace_stop"() : () -> ()
    %26 = vector.shape_cast %25 : vector<2x8x16xf32> to vector<2x128xf32>
    %c0_11 = arith.constant 0 : index
    %c0_12 = arith.constant 0 : index
    %27 = vector.load %arg3[%c0_11, %c0_12] : memref<2x128xf32, #tpu.memory_space<vmem>>, vector<2x128xf32>
    tpu.vector_store %arg3[%c0_11, %c0_12], %26 {strides = array<i32>} : memref<2x128xf32, #tpu.memory_space<vmem>>, vector<2x128xf32>,
    return
  }
  func.func @transform_0(%arg0: i32) -> (i32, i32, i32) {
    %c0_i32 = arith.constant 0 : i32
    %c0_i32_0 = arith.constant 0 : i32
    %c0_i32_1 = arith.constant 0 : i32
    return %arg0, %c0_i32, %c0_i32_0 : i32, i32, i32
  }
  func.func @transform_1(%arg0: i32) -> (i32, i32) {
    %c0_i32 = arith.constant 0 : i32
    %c0_i32_0 = arith.constant 0 : i32
    %c0_i32_1 = arith.constant 0 : i32
    return %c0_i32, %c0_i32_0 : i32, i32
  }
  func.func @transform_2(%arg0: i32) -> (i32, i32) {
    %c0_i32 = arith.constant 0 : i32
    %c0_i32_0 = arith.constant 0 : i32
    return %arg0, %c0_i32 : i32, i32
  }
}

</mosaic_0001>

<llo_original>
// kernel: tpu_custom_call.1
$region0: #{tpu_custom_call.1}
  #allocation0 [shape = 'u32[]', space=smem, size = 0x4, offset = 0x4, fixed_abs, tag = 'smem constant byte address 0x4 - core index']
  #allocation1 [shape = 'u32[144,128]{1,0:T(1,128)}', space=vmem, size = 0x12000, scoped, tag = 'internal scratch']
  %s0 = inlined_call_operand.hbm [shape: f32[2,8,32], index: 0, kind: input, shape index: {}]
  %s1 = inlined_call_operand.hbm [shape: f32[32,48], index: 1, kind: input, shape index: {}]
  %s2 = inlined_call_operand.hbm [shape: f32[2,128], index: 2, kind: output, shape index: {}]
  %s3 = sld [smem:[#allocation0]]
  $region26: #{tpu_custom_call.1} parent=0
    _
  %s5 = ssub.s32 1, %s3
  %s6 = scalar_select 0, %s5, %s3
  $region1: #{tpu_custom_call.1} parent=0
    #allocation2 [shape = 'u8[8192]{0}', space=vmem, size = 0x2000, scoped, tag = 'input window, operand 0, single buffered']
    #allocation3 [shape = 's32[1]{0}', space=sflag, size = 0x4, scoped, tag = 'scoped memory for tpu_custom_call.1']
    #allocation4 [shape = 's32[1]{0}', space=sflag, size = 0x4, scoped, tag = 'scoped memory for tpu_custom_call.1']
    #allocation5 [shape = 'u8[16384]{0}', space=vmem, size = 0x4000, scoped, tag = 'input window, operand 1, single buffered']
    #allocation6 [shape = 's32[1]{0}', space=sflag, size = 0x4, scoped, tag = 'scoped memory for tpu_custom_call.1']
    #allocation7 [shape = 'u8[1024]{0}', space=vmem, size = 0x400, scoped, tag = 'output window, operand 0, single buffered']
    %7 = vsyncpa [#allocation3], 0
    %8 = vsyncpa [#allocation6], 0
    %9 = vsyncpa [#allocation4], 0
    // Predicated region
    $region2: #{tpu_custom_call.1} parent=1 // pred_check
      _
    $region3: #{tpu_custom_call.1} parent=1 // pred_check_branch
      %11 = sbr.rel (0) target = $region5
    $region4: #{tpu_custom_call.1} parent=1 // pred_region
      %s13 = ssub.s32 256, 256
      %14 = vsyncadd [#allocation3], %s13
      %s15 = sshll.u32 [#allocation2], 4
      %s16 = int_to_ptr.vmem [resolvable:$true] %s15
      %21 = dma.hbm_to_vmem [thread:$0]  %s0, 256, %s16, [#allocation3], 128, 128, 8
    $region5: #{tpu_custom_call.1} parent=1 // pred_fallthru
      _
    // Predicated region
    $region6: #{tpu_custom_call.1} parent=1 // pred_check
      _
    $region7: #{tpu_custom_call.1} parent=1 // pred_check_branch
      %23 = sbr.rel (0) target = $region9
    $region8: #{tpu_custom_call.1} parent=1 // pred_region
      %s25 = ssub.s32 512, 512
      %26 = vsyncadd [#allocation6], %s25
      %s27 = sshll.u32 [#allocation5], 4
      %s28 = int_to_ptr.vmem [resolvable:$true] %s27
      %33 = dma.hbm_to_vmem [thread:$0]  %s1, 512, %s28, [#allocation6], 128, 128, 8
    $region9: #{tpu_custom_call.1} parent=1 // pred_fallthru
      _
    // Predicated region
    $region10: #{tpu_custom_call.1} parent=1 // pred_check
      _
    $region11: #{tpu_custom_call.1} parent=1 // pred_check_branch
      %35 = sbr.rel (0) target = $region13
    $region12: #{tpu_custom_call.1} parent=1 // pred_region
      %36 = dma.done [#allocation3], 256
    $region13: #{tpu_custom_call.1} parent=1 // pred_fallthru
      _
    // Predicated region
    $region14: #{tpu_custom_call.1} parent=1 // pred_check
      _
    $region15: #{tpu_custom_call.1} parent=1 // pred_check_branch
      %38 = sbr.rel (0) target = $region17
    $region16: #{tpu_custom_call.1} parent=1 // pred_region
      %39 = dma.done [#allocation6], 512
    $region17: #{tpu_custom_call.1} parent=1 // pred_fallthru
      _
    %v40 = vld [vmem:[#allocation2] sm:$0xff]
    %v41 = vld [vmem:[#allocation2 + $0x8] sm:$0xff]
    %v42 = vld [vmem:[#allocation5] sm:$0xff]
    %v43 = vld [vmem:[#allocation5 + $0x8] sm:$0xff]
    %v44 = vld [vmem:[#allocation5 + $0x10] sm:$0xff]
    %v45 = vld [vmem:[#allocation5 + $0x18] sm:$0xff]
    %vm46 = vcmask 261120
    %v48 = vsel %vm46, %v40, 0
    %v51 = vsel %vm46, %v41, 0
    %53 = vmatprep.subr.mxu0 0.0
    %54 = vmatpush1.msra.mxu0 %v42
    %55 = vmatprep.subr.mxu0 0.0
    %56 = vmatpush1.msra.mxu0 %v43
    %57 = vmatprep.subr.mxu0 0.0
    %58 = vmatpush1.msra.mxu0 %v44
    %59 = vmatprep.subr.mxu0 0.0
    %60 = vmatpush1.msra.mxu0 %v45
    %61 = vmatprep.subr.mxu0 0.0
    %62 = vmatpush1.msra.mxu0 0.0
    %63 = vmatprep.subr.mxu0 0.0
    %64 = vmatpush1.msra.mxu0 0.0
    %65 = vmatprep.subr.mxu0 0.0
    %66 = vmatpush1.msra.mxu0 0.0
    %67 = vmatprep.subr.mxu0 0.0
    %68 = vmatpush1.msra.mxu0 0.0
    %69 = vmatprep.subr.mxu0 0.0
    %70 = vmatpush1.msra.mxu0 0.0
    %71 = vmatprep.subr.mxu0 0.0
    %72 = vmatpush1.msra.mxu0 0.0
    %73 = vmatprep.subr.mxu0 0.0
    %74 = vmatpush1.msra.mxu0 0.0
    %75 = vmatprep.subr.mxu0 0.0
    %76 = vmatpush1.msra.mxu0 0.0
    %77 = vmatprep.subr.mxu0 0.0
    %78 = vmatpush1.msra.mxu0 0.0
    %79 = vmatprep.subr.mxu0 0.0
    %80 = vmatpush1.msra.mxu0 0.0
    %81 = vmatprep.subr.mxu0 0.0
    %82 = vmatpush1.msra.mxu0 0.0
    %83 = vmatprep.subr.mxu0 0.0
    %84 = vmatpush1.msra.mxu0 0.0
    %85 = vmatprep.subr.mxu0 0.0
    %86 = vmatpush1.msra.mxu0 0.0
    %87 = vmatprep.subr.mxu0 0.0
    %88 = vmatpush1.msra.mxu0 0.0
    %89 = vmatprep.subr.mxu0 0.0
    %90 = vmatpush1.msra.mxu0 0.0
    %91 = vmatprep.subr.mxu0 0.0
    %92 = vmatpush1.msra.mxu0 0.0
    %93 = vmatprep.subr.mxu0 0.0
    %94 = vmatpush1.msra.mxu0 0.0
    %95 = vmatprep.subr.mxu0 0.0
    %96 = vmatpush1.msra.mxu0 0.0
    %97 = vmatprep.subr.mxu0 0.0
    %98 = vmatpush1.msra.mxu0 0.0
    %99 = vmatprep.subr.mxu0 0.0
    %100 = vmatpush1.msra.mxu0 0.0
    %101 = vmatprep.subr.mxu0 0.0
    %102 = vmatpush1.msra.mxu0 0.0
    %103 = vmatprep.subr.mxu0 0.0
    %104 = vmatpush1.msra.mxu0 0.0
    %105 = vmatprep.subr.mxu0 0.0
    %106 = vmatpush1.msra.mxu0 0.0
    %107 = vmatprep.subr.mxu0 0.0
    %108 = vmatpush1.msra.mxu0 0.0
    %109 = vmatprep.subr.mxu0 0.0
    %110 = vmatpush1.msra.mxu0 0.0
    %111 = vmatprep.subr.mxu0 0.0
    %112 = vmatpush1.msra.mxu0 0.0
    %113 = vmatprep.subr.mxu0 0.0
    %114 = vmatpush1.msra.mxu0 0.0
    %115 = vmatprep.subr.mxu0 0.0
    %116 = vmatpush1.msra.mxu0 0.0
    %117 = vmatprep.mubr.f32.mxu0 0.0
    %118 = vmatmul.mubr.f32.gmra.mrb[0].mxu0 %v48
    %v119 = vpop.f32.mrb[0].mxu0
    %v120 = vadd.f32 0.0, %v119
    %v121 = vpop.f32.mrb[0].mxu0
    %122 = vmatprep.mubr.f32.mxu0 0.0
    %123 = vmatmul.mubr.f32.gmra.mrb[0].mxu0 %v51
    %v124 = vpop.f32.mrb[0].mxu0
    %v125 = vadd.f32 0.0, %v124
    %v126 = vpop.f32.mrb[0].mxu0
    %127 = vdwg.mxu0
    %129 = vrot.lane.b32.xlu0 %v120, 112
    %v130 = vpop.permute.xlu0 %129
    %vm131 = vcmask 130048
    %v132 = vsel %vm131, %v130, 0
    %v134 = vsel %vm131, %v120, 0
    %136 = vmatprep.subr.mxu0 0.0
    %137 = vmatpush1.xpose.msra.mxu0 %v134
    %138 = vmatprep.subr.mxu0 0.0
    %139 = vmatpush1.xpose.msra.mxu0 0.0
    %140 = vmatprep.subr.mxu0 0.0
    %141 = vmatpush1.xpose.msra.mxu0 0.0
    %142 = vmatprep.subr.mxu0 0.0
    %143 = vmatpush1.xpose.msra.mxu0 0.0
    %144 = vmatprep.subr.mxu0 0.0
    %145 = vmatpush1.xpose.msra.mxu0 0.0
    %146 = vmatprep.subr.mxu0 0.0
    %147 = vmatpush1.xpose.msra.mxu0 0.0
    %148 = vmatprep.subr.mxu0 0.0
    %149 = vmatpush1.xpose.msra.mxu0 0.0
    %150 = vmatprep.subr.mxu0 0.0
    %151 = vmatpush1.xpose.msra.mxu0 0.0
    %152 = vmatprep.subr.mxu0 0.0
    %153 = vmatpush1.xpose.msra.mxu0 0.0
    %154 = vmatprep.subr.mxu0 0.0
    %155 = vmatpush1.xpose.msra.mxu0 0.0
    %156 = vmatprep.subr.mxu0 0.0
    %157 = vmatpush1.xpose.msra.mxu0 0.0
    %158 = vmatprep.subr.mxu0 0.0
    %159 = vmatpush1.xpose.msra.mxu0 0.0
    %160 = vmatprep.subr.mxu0 0.0
    %161 = vmatpush1.xpose.msra.mxu0 0.0
    %162 = vmatprep.subr.mxu0 0.0
    %163 = vmatpush1.xpose.msra.mxu0 0.0
    %164 = vmatprep.subr.mxu0 0.0
    %165 = vmatpush1.xpose.msra.mxu0 0.0
    %166 = vmatprep.subr.mxu0 0.0
    %167 = vmatpush1.xpose.msra.mxu0 0.0
    %168 = vmatprep.subr.mxu0 0.0
    %169 = vmatpush1.xpose.msra.mxu0 0.0
    %170 = vmatprep.subr.mxu0 0.0
    %171 = vmatpush1.xpose.msra.mxu0 0.0
    %172 = vmatprep.subr.mxu0 0.0
    %173 = vmatpush1.xpose.msra.mxu0 0.0
    %174 = vmatprep.subr.mxu0 0.0
    %175 = vmatpush1.xpose.msra.mxu0 0.0
    %176 = vmatprep.subr.mxu0 0.0
    %177 = vmatpush1.xpose.msra.mxu0 0.0
    %178 = vmatprep.subr.mxu0 0.0
    %179 = vmatpush1.xpose.msra.mxu0 0.0
    %180 = vmatprep.subr.mxu0 0.0
    %181 = vmatpush1.xpose.msra.mxu0 0.0
    %182 = vmatprep.subr.mxu0 0.0
    %183 = vmatpush1.xpose.msra.mxu0 0.0
    %184 = vmatprep.subr.mxu0 0.0
    %185 = vmatpush1.xpose.msra.mxu0 0.0
    %186 = vmatprep.subr.mxu0 0.0
    %187 = vmatpush1.xpose.msra.mxu0 0.0
    %188 = vmatprep.subr.mxu0 0.0
    %189 = vmatpush1.xpose.msra.mxu0 0.0
    %190 = vmatprep.subr.mxu0 0.0
    %191 = vmatpush1.xpose.msra.mxu0 0.0
    %192 = vmatprep.subr.mxu0 0.0
    %193 = vmatpush1.xpose.msra.mxu0 0.0
    %194 = vmatprep.subr.mxu0 0.0
    %195 = vmatpush1.xpose.msra.mxu0 0.0
    %196 = vmatprep.subr.mxu0 0.0
    %197 = vmatpush1.xpose.msra.mxu0 0.0
    %198 = vmatprep.subr.mxu0 0.0
    %199 = vmatpush1.xpose.msra.mxu0 0.0
    %200 = vmatprep.mubr.f32.mxu0 0.0
    %201 = vmatmul.mubr.f32.gmra.mrb[0].mxu0 %v132
    %v202 = vpop.f32.mrb[0].mxu0
    %v203 = vadd.f32 0.0, %v202
    %v204 = vpop.f32.mrb[0].mxu0
    %205 = vdwg.mxu0
    %207 = vrot.lane.b32.xlu0 %v125, 112
    %v208 = vpop.permute.xlu0 %207
    %v209 = vsel %vm131, %v208, 0
    %v211 = vsel %vm131, %v125, 0
    %213 = vmatprep.subr.mxu0 0.0
    %214 = vmatpush1.xpose.msra.mxu0 %v211
    %215 = vmatprep.subr.mxu0 0.0
    %216 = vmatpush1.xpose.msra.mxu0 0.0
    %217 = vmatprep.subr.mxu0 0.0
    %218 = vmatpush1.xpose.msra.mxu0 0.0
    %219 = vmatprep.subr.mxu0 0.0
    %220 = vmatpush1.xpose.msra.mxu0 0.0
    %221 = vmatprep.subr.mxu0 0.0
    %222 = vmatpush1.xpose.msra.mxu0 0.0
    %223 = vmatprep.subr.mxu0 0.0
    %224 = vmatpush1.xpose.msra.mxu0 0.0
    %225 = vmatprep.subr.mxu0 0.0
    %226 = vmatpush1.xpose.msra.mxu0 0.0
    %227 = vmatprep.subr.mxu0 0.0
    %228 = vmatpush1.xpose.msra.mxu0 0.0
    %229 = vmatprep.subr.mxu0 0.0
    %230 = vmatpush1.xpose.msra.mxu0 0.0
    %231 = vmatprep.subr.mxu0 0.0
    %232 = vmatpush1.xpose.msra.mxu0 0.0
    %233 = vmatprep.subr.mxu0 0.0
    %234 = vmatpush1.xpose.msra.mxu0 0.0
    %235 = vmatprep.subr.mxu0 0.0
    %236 = vmatpush1.xpose.msra.mxu0 0.0
    %237 = vmatprep.subr.mxu0 0.0
    %238 = vmatpush1.xpose.msra.mxu0 0.0
    %239 = vmatprep.subr.mxu0 0.0
    %240 = vmatpush1.xpose.msra.mxu0 0.0
    %241 = vmatprep.subr.mxu0 0.0
    %242 = vmatpush1.xpose.msra.mxu0 0.0
    %243 = vmatprep.subr.mxu0 0.0
    %244 = vmatpush1.xpose.msra.mxu0 0.0
    %245 = vmatprep.subr.mxu0 0.0
    %246 = vmatpush1.xpose.msra.mxu0 0.0
    %247 = vmatprep.subr.mxu0 0.0
    %248 = vmatpush1.xpose.msra.mxu0 0.0
    %249 = vmatprep.subr.mxu0 0.0
    %250 = vmatpush1.xpose.msra.mxu0 0.0
    %251 = vmatprep.subr.mxu0 0.0
    %252 = vmatpush1.xpose.msra.mxu0 0.0
    %253 = vmatprep.subr.mxu0 0.0
    %254 = vmatpush1.xpose.msra.mxu0 0.0
    %255 = vmatprep.subr.mxu0 0.0
    %256 = vmatpush1.xpose.msra.mxu0 0.0
    %257 = vmatprep.subr.mxu0 0.0
    %258 = vmatpush1.xpose.msra.mxu0 0.0
    %259 = vmatprep.subr.mxu0 0.0
    %260 = vmatpush1.xpose.msra.mxu0 0.0
    %261 = vmatprep.subr.mxu0 0.0
    %262 = vmatpush1.xpose.msra.mxu0 0.0
    %263 = vmatprep.subr.mxu0 0.0
    %264 = vmatpush1.xpose.msra.mxu0 0.0
    %265 = vmatprep.subr.mxu0 0.0
    %266 = vmatpush1.xpose.msra.mxu0 0.0
    %267 = vmatprep.subr.mxu0 0.0
    %268 = vmatpush1.xpose.msra.mxu0 0.0
    %269 = vmatprep.subr.mxu0 0.0
    %270 = vmatpush1.xpose.msra.mxu0 0.0
    %271 = vmatprep.subr.mxu0 0.0
    %272 = vmatpush1.xpose.msra.mxu0 0.0
    %273 = vmatprep.subr.mxu0 0.0
    %274 = vmatpush1.xpose.msra.mxu0 0.0
    %275 = vmatprep.subr.mxu0 0.0
    %276 = vmatpush1.xpose.msra.mxu0 0.0
    %277 = vmatprep.mubr.f32.mxu0 0.0
    %278 = vmatmul.mubr.f32.gmra.mrb[0].mxu0 %v209
    %v279 = vpop.f32.mrb[0].mxu0
    %v280 = vadd.f32 0.0, %v279
    %v281 = vpop.f32.mrb[0].mxu0
    %282 = vdwg.mxu0
    %v283 = vmul.f32 %v203, 0.25
    %v284 = vmul.f32 %v280, 0.25
    %v285 = vlaneseq
    %v286 = vshrl.u32 %v285, 7
    %v287 = vlaneseq
    %v288 = vand.u32 %v287, 127
    %vm289 = vcmp.ge.s32.totalorder %v286, %v288
    %v290 = vsel %vm289, %v283, -inf
    %v291 = vsel %vm289, %v284, -inf
    %vm292 = vcmask 64512
    %v293 = vsel %vm292, %v290, -inf
    %294 = vmax.xlane.f32.xlu0 %v293
    %v295 = vpop.xlane.xlu0 %294
    %v296 = vsel %vm292, %v291, -inf
    %297 = vmax.xlane.f32.xlu0 %v296
    %v298 = vpop.xlane.xlu0 %297
    %v299 = vsub.f32 %v290, %v295
    %v300 = vsub.f32 %v291, %v298
    %v301 = vmul.f32 %v299, 1.442695
    %v302 = vpow.pop %v301
    %v303 = vmul.f32 %v300, 1.442695
    %v304 = vpow.pop %v303
    %v305 = vsel %vm292, %v302, 0.0
    %306 = vadd.xlane.f32.xlu0 %v305
    %v307 = vpop.xlane.xlu0 %306
    %v308 = vsel %vm292, %v304, 0.0
    %309 = vadd.xlane.f32.xlu0 %v308
    %v310 = vpop.xlane.xlu0 %309
    %v311 = vrcp.pop %v307
    %v312 = vrcp.pop %v310
    %v313 = vmul.f32 %v302, %v311
    %v314 = vmul.f32 %v304, %v312
    %315 = vrot.lane.b32.xlu0 %v120, 96
    %v316 = vpop.permute.xlu0 %315
    %v319 = vsel %vm292, %v313, 0
    %321 = vmatprep.subr.mxu0 0.0
    %322 = vmatpush1.msra.mxu0 %v316
    %323 = vmatprep.subr.mxu0 0.0
    %324 = vmatpush1.msra.mxu0 0.0
    %325 = vmatprep.subr.mxu0 0.0
    %326 = vmatpush1.msra.mxu0 0.0
    %327 = vmatprep.subr.mxu0 0.0
    %328 = vmatpush1.msra.mxu0 0.0
    %329 = vmatprep.subr.mxu0 0.0
    %330 = vmatpush1.msra.mxu0 0.0
    %331 = vmatprep.subr.mxu0 0.0
    %332 = vmatpush1.msra.mxu0 0.0
    %333 = vmatprep.subr.mxu0 0.0
    %334 = vmatpush1.msra.mxu0 0.0
    %335 = vmatprep.subr.mxu0 0.0
    %336 = vmatpush1.msra.mxu0 0.0
    %337 = vmatprep.subr.mxu0 0.0
    %338 = vmatpush1.msra.mxu0 0.0
    %339 = vmatprep.subr.mxu0 0.0
    %340 = vmatpush1.msra.mxu0 0.0
    %341 = vmatprep.subr.mxu0 0.0
    %342 = vmatpush1.msra.mxu0 0.0
    %343 = vmatprep.subr.mxu0 0.0
    %344 = vmatpush1.msra.mxu0 0.0
    %345 = vmatprep.subr.mxu0 0.0
    %346 = vmatpush1.msra.mxu0 0.0
    %347 = vmatprep.subr.mxu0 0.0
    %348 = vmatpush1.msra.mxu0 0.0
    %349 = vmatprep.subr.mxu0 0.0
    %350 = vmatpush1.msra.mxu0 0.0
    %351 = vmatprep.subr.mxu0 0.0
    %352 = vmatpush1.msra.mxu0 0.0
    %353 = vmatprep.subr.mxu0 0.0
    %354 = vmatpush1.msra.mxu0 0.0
    %355 = vmatprep.subr.mxu0 0.0
    %356 = vmatpush1.msra.mxu0 0.0
    %357 = vmatprep.subr.mxu0 0.0
    %358 = vmatpush1.msra.mxu0 0.0
    %359 = vmatprep.subr.mxu0 0.0
    %360 = vmatpush1.msra.mxu0 0.0
    %361 = vmatprep.subr.mxu0 0.0
    %362 = vmatpush1.msra.mxu0 0.0
    %363 = vmatprep.subr.mxu0 0.0
    %364 = vmatpush1.msra.mxu0 0.0
    %365 = vmatprep.subr.mxu0 0.0
    %366 = vmatpush1.msra.mxu0 0.0
    %367 = vmatprep.subr.mxu0 0.0
    %368 = vmatpush1.msra.mxu0 0.0
    %369 = vmatprep.subr.mxu0 0.0
    %370 = vmatpush1.msra.mxu0 0.0
    %371 = vmatprep.subr.mxu0 0.0
    %372 = vmatpush1.msra.mxu0 0.0
    %373 = vmatprep.subr.mxu0 0.0
    %374 = vmatpush1.msra.mxu0 0.0
    %375 = vmatprep.subr.mxu0 0.0
    %376 = vmatpush1.msra.mxu0 0.0
    %377 = vmatprep.subr.mxu0 0.0
    %378 = vmatpush1.msra.mxu0 0.0
    %379 = vmatprep.subr.mxu0 0.0
    %380 = vmatpush1.msra.mxu0 0.0
    %381 = vmatprep.subr.mxu0 0.0
    %382 = vmatpush1.msra.mxu0 0.0
    %383 = vmatprep.subr.mxu0 0.0
    %384 = vmatpush1.msra.mxu0 0.0
    %385 = vmatprep.mubr.f32.mxu0 0.0
    %386 = vmatmul.mubr.f32.gmra.mrb[0].mxu0 %v319
    %v387 = vpop.f32.mrb[0].mxu0
    %v388 = vadd.f32 0.0, %v387
    %v389 = vpop.f32.mrb[0].mxu0
    %390 = vdwg.mxu0
    %391 = vrot.lane.b32.xlu0 %v125, 96
    %v392 = vpop.permute.xlu0 %391
    %v395 = vsel %vm292, %v314, 0
    %397 = vmatprep.subr.mxu0 0.0
    %398 = vmatpush1.msra.mxu0 %v392
    %399 = vmatprep.subr.mxu0 0.0
    %400 = vmatpush1.msra.mxu0 0.0
    %401 = vmatprep.subr.mxu0 0.0
    %402 = vmatpush1.msra.mxu0 0.0
    %403 = vmatprep.subr.mxu0 0.0
    %404 = vmatpush1.msra.mxu0 0.0
    %405 = vmatprep.subr.mxu0 0.0
    %406 = vmatpush1.msra.mxu0 0.0
    %407 = vmatprep.subr.mxu0 0.0
    %408 = vmatpush1.msra.mxu0 0.0
    %409 = vmatprep.subr.mxu0 0.0
    %410 = vmatpush1.msra.mxu0 0.0
    %411 = vmatprep.subr.mxu0 0.0
    %412 = vmatpush1.msra.mxu0 0.0
    %413 = vmatprep.subr.mxu0 0.0
    %414 = vmatpush1.msra.mxu0 0.0
    %415 = vmatprep.subr.mxu0 0.0
    %416 = vmatpush1.msra.mxu0 0.0
    %417 = vmatprep.subr.mxu0 0.0
    %418 = vmatpush1.msra.mxu0 0.0
    %419 = vmatprep.subr.mxu0 0.0
    %420 = vmatpush1.msra.mxu0 0.0
    %421 = vmatprep.subr.mxu0 0.0
    %422 = vmatpush1.msra.mxu0 0.0
    %423 = vmatprep.subr.mxu0 0.0
    %424 = vmatpush1.msra.mxu0 0.0
    %425 = vmatprep.subr.mxu0 0.0
    %426 = vmatpush1.msra.mxu0 0.0
    %427 = vmatprep.subr.mxu0 0.0
    %428 = vmatpush1.msra.mxu0 0.0
    %429 = vmatprep.subr.mxu0 0.0
    %430 = vmatpush1.msra.mxu0 0.0
    %431 = vmatprep.subr.mxu0 0.0
    %432 = vmatpush1.msra.mxu0 0.0
    %433 = vmatprep.subr.mxu0 0.0
    %434 = vmatpush1.msra.mxu0 0.0
    %435 = vmatprep.subr.mxu0 0.0
    %436 = vmatpush1.msra.mxu0 0.0
    %437 = vmatprep.subr.mxu0 0.0
    %438 = vmatpush1.msra.mxu0 0.0
    %439 = vmatprep.subr.mxu0 0.0
    %440 = vmatpush1.msra.mxu0 0.0
    %441 = vmatprep.subr.mxu0 0.0
    %442 = vmatpush1.msra.mxu0 0.0
    %443 = vmatprep.subr.mxu0 0.0
    %444 = vmatpush1.msra.mxu0 0.0
    %445 = vmatprep.subr.mxu0 0.0
    %446 = vmatpush1.msra.mxu0 0.0
    %447 = vmatprep.subr.mxu0 0.0
    %448 = vmatpush1.msra.mxu0 0.0
    %449 = vmatprep.subr.mxu0 0.0
    %450 = vmatpush1.msra.mxu0 0.0
    %451 = vmatprep.subr.mxu0 0.0
    %452 = vmatpush1.msra.mxu0 0.0
    %453 = vmatprep.subr.mxu0 0.0
    %454 = vmatpush1.msra.mxu0 0.0
    %455 = vmatprep.subr.mxu0 0.0
    %456 = vmatpush1.msra.mxu0 0.0
    %457 = vmatprep.subr.mxu0 0.0
    %458 = vmatpush1.msra.mxu0 0.0
    %459 = vmatprep.subr.mxu0 0.0
    %460 = vmatpush1.msra.mxu0 0.0
    %461 = vmatprep.mubr.f32.mxu0 0.0
    %462 = vmatmul.mubr.f32.gmra.mrb[0].mxu0 %v395
    %v463 = vpop.f32.mrb[0].mxu0
    %v464 = vadd.f32 0.0, %v463
    %v465 = vpop.f32.mrb[0].mxu0
    %466 = vdwg.mxu0
    %v467 = vcombine.high %v388, 0.0
    %v469 = vunpack.c.l.s4 1983009808
    %v470 = vunpack.c.0.s8 %v469
    %v471 = vlaneseq
    %v472 = vshrl.u32 %v471, 7
    %v473 = vsub.s32 %v470, %v472
    %v474 = vrot.slane %v388, %v473
    %v476 = vunpack.c.l.s4 1983009808
    %v477 = vunpack.c.0.s8 %v476
    %v478 = vlaneseq
    %v479 = vshrl.u32 %v478, 7
    %v480 = vsub.s32 %v477, %v479
    %v481 = vrot.slane %v467, %v480
    %v482 = vcombine.high %v464, 0.0
    %v484 = vunpack.c.l.s4 1983009808
    %v485 = vunpack.c.0.s8 %v484
    %v486 = vlaneseq
    %v487 = vshrl.u32 %v486, 7
    %v488 = vsub.s32 %v485, %v487
    %v489 = vrot.slane %v464, %v488
    %v491 = vunpack.c.l.s4 1983009808
    %v492 = vunpack.c.0.s8 %v491
    %v493 = vlaneseq
    %v494 = vshrl.u32 %v493, 7
    %v495 = vsub.s32 %v492, %v494
    %v496 = vrot.slane %v482, %v495
    %v497 = vcombine.low %v474, %v489
    %v498 = vcombine.high %v474, %v489
    %v500 = vunpack.c.l.s4 1934713408
    %v501 = vunpack.c.0.s8 %v500
    %v502 = vlaneseq
    %v503 = vshrl.u32 %v502, 7
    %v504 = vsub.s32 %v501, %v503
    %v505 = vrot.slane %v497, %v504
    %v507 = vunpack.c.l.s4 1934713408
    %v508 = vunpack.c.0.s8 %v507
    %v509 = vlaneseq
    %v510 = vshrl.u32 %v509, 7
    %v511 = vsub.s32 %v508, %v510
    %v512 = vrot.slane %v498, %v511
    %v513 = vcombine.low %v481, %v496
    %v514 = vcombine.high %v481, %v496
    %v516 = vunpack.c.l.s4 1934713408
    %v517 = vunpack.c.0.s8 %v516
    %v518 = vlaneseq
    %v519 = vshrl.u32 %v518, 7
    %v520 = vsub.s32 %v517, %v519
    %v521 = vrot.slane %v513, %v520
    %v523 = vunpack.c.l.s4 1934713408
    %v524 = vunpack.c.0.s8 %v523
    %v525 = vlaneseq
    %v526 = vshrl.u32 %v525, 7
    %v527 = vsub.s32 %v524, %v526
    %v528 = vrot.slane %v514, %v527
    %v529 = vcombine.high %v505, 0.0
    %v530 = vcombine.high %v512, 0.0
    %v531 = vcombine.high %v521, 0.0
    %v532 = vcombine.high %v528, 0.0
    %534 = vrot.lane.b32.xlu0 %v529, 16
    %v535 = vpop.permute.xlu0 %534
    %538 = vrot.lane.b32.xlu0 %v512, 32
    %v539 = vpop.permute.xlu0 %538
    %542 = vrot.lane.b32.xlu0 %v530, 48
    %v543 = vpop.permute.xlu0 %542
    %546 = vrot.lane.b32.xlu0 %v521, 64
    %v547 = vpop.permute.xlu0 %546
    %550 = vrot.lane.b32.xlu0 %v531, 80
    %v551 = vpop.permute.xlu0 %550
    %554 = vrot.lane.b32.xlu0 %v528, 96
    %v555 = vpop.permute.xlu0 %554
    %558 = vrot.lane.b32.xlu0 %v532, 112
    %v559 = vpop.permute.xlu0 %558
    %v561 = vsel %vm131, %v505, %v535
    %v562 = vsel %vm46, %v561, %v539
    %vm563 = vcmask 392192
    %v564 = vsel %vm563, %v562, %v543
    %vm565 = vcmask 523264
    %v566 = vsel %vm565, %v564, %v547
    %vm567 = vcmask 654336
    %v568 = vsel %vm567, %v566, %v551
    %vm569 = vcmask 785408
    %v570 = vsel %vm569, %v568, %v555
    %vm571 = vcmask 916480
    %v572 = vsel %vm571, %v570, %v559
    %573 = vst [vmem:[#allocation7] sm:$0x3] %v572
    // Predicated region
    $region18: #{tpu_custom_call.1} parent=1 // pred_check
      _
    $region19: #{tpu_custom_call.1} parent=1 // pred_check_branch
      %575 = sbr.rel (0) target = $region21
    $region20: #{tpu_custom_call.1} parent=1 // pred_region
      %s577 = ssub.s32 32, 32
      %578 = vsyncadd [#allocation4], %s577
      %s580 = sshll.u32 [#allocation7], 4
      %s581 = int_to_ptr.vmem [resolvable:$true] %s580
      %583 = dma.vmem_to_hbm [thread:$0]  %s581, 32, %s2, [#allocation4]
    $region21: #{tpu_custom_call.1} parent=1 // pred_fallthru
      _
    // Predicated region
    $region22: #{tpu_custom_call.1} parent=1 // pred_check
      _
    $region23: #{tpu_custom_call.1} parent=1 // pred_check_branch
      %585 = sbr.rel (0) target = $region25
    $region24: #{tpu_custom_call.1} parent=1 // pred_region
      %586 = dma.done [#allocation4], 32
    $region25: #{tpu_custom_call.1} parent=1 // pred_fallthru
      _
    %587 = vsyncpa [#allocation3], 1
    %588 = vsyncpa [#allocation6], 1
    %589 = vsyncpa [#allocation4], 1

</llo_original>
